<compile_context>
chip_gen: v5e
topology: v5e:2x2
jax: 0.10.0
libtpu: 0.0.40
codegen_flags: <defaults>
</compile_context>

<pallas_src>
import functools
import math

import jax
import jax.numpy as jnp
from jax.experimental import pallas as pl
from jax.experimental.pallas import tpu as pltpu


def _round_up(x, m):
    return ((x + m - 1) // m) * m


def _vmem_capacity_bytes():
    """Physical VMEM of the local TPU generation (fallback: 128 MiB)."""
    try:
        info = pltpu.get_tpu_info()
        for name in ("vmem_capacity_bytes", "vmem_bytes"):
            cap = getattr(info, name, None)
            if cap:
                return int(cap)
    except Exception:
        pass
    return 128 << 20


def _vmem_limit(step_bytes, vmem_cap):
    """Scoped-VMEM limit: room for double-buffered blocks, capped per generation."""
    hi = max(32 << 20, min(vmem_cap // 2, 64 << 20))
    return int(min(max(4 * step_bytes, 32 << 20), hi))


def _choose_tiles(N, C, HW, itemsize, vmem_cap):
    """Pick (TL, CL, n_tiles): DMA tile lanes, compute chunk lanes, pixel tiles."""
    # Compute chunk: keep the (C, CL) f32 working set ~<= 64 KiB (~16 vregs).
    cl = (64 * 1024) // max(4, C * 4)
    cl = max(128, min(1024, (cl // 128) * 128))
    # DMA tile: multi-MiB logits blocks (>=85% of HBM roofline), scaled with VMEM
    # so double-buffered residency stays small on v7x's 64 MiB as well.
    per_buf = int(min(8 << 20, max(2 << 20, vmem_cap // 16)))
    tl_raw = min(per_buf // max(1, C * itemsize), 32768)
    tl = max(cl, (tl_raw // cl) * cl)
    # Never exceed the (128-rounded) pixel-row length.
    row = _round_up(HW, 128)
    if tl >= row:
        tl = row
        cl = math.gcd(tl, cl)  # both are multiples of 128 -> cl stays a multiple of 128
    n_tiles = -(-HW // tl)
    # v7x megacore: keep at least 2 grid steps when possible so both TCs get work.
    if N * n_tiles < 2 and tl > cl:
        half = _round_up(-(-HW // 2), cl)
        tl = max(cl, min(tl, half))
        n_tiles = -(-HW // tl)
    return tl, cl, n_tiles


def _pow_factor(fm, gamma):
    """(fm)^gamma with integer gamma lowered to VALU multiplies."""
    g = float(gamma)
    if g == 0.0:
        return jnp.ones_like(fm)
    if g.is_integer() and 1.0 <= g <= 16.0:
        n = int(g)
        acc = None
        base = fm
        while n:
            if n & 1:
                acc = base if acc is None else acc * base
            n >>= 1
            if n:
                base = base * base
        return acc
    return jnp.power(fm, jnp.float32(g))


def _focal_chunk_loss(logits_ref, labels_ref, start, cl, gamma):
    """Per-pixel focal NLL for a (C, cl) lane chunk; returns (1, cl) float32."""
    x = logits_ref[:, pl.ds(start, cl)].astype(jnp.float32)        # (C, cl)
    lab = labels_ref[:, pl.ds(start, cl)].astype(jnp.int32)        # (1, cl)

    # Gather the label-class logit from x BEFORE the per-class transcendentals
    # so the (C, cl) temporaries' live ranges end at the exp.
    cls = jax.lax.broadcasted_iota(jnp.int32, x.shape, 0)          # (C, cl)
    x_y = jnp.sum(jnp.where(cls == lab, x, 0.0),
                  axis=0, keepdims=True)                           # (1, cl)

    m = jnp.max(x, axis=0, keepdims=True)                          # (1, cl)  XLU
    s = jnp.sum(jnp.exp(x - m), axis=0, keepdims=True)             # (1, cl)  EUP+XLU

    log_p_y = (x_y - m) - jnp.log(s)                               # log_softmax @ label
    p_y = jnp.exp(log_p_y)                                         # softmax @ label
    return -(_pow_factor(1.0 - p_y, gamma) * log_p_y)              # (1, cl)


def _focal_psum_kernel(logits_ref, labels_ref, out_ref, *, gamma, hw, tl, cl):
    """Fused reduction: per-grid-step (1, 128) partial sum of the loss."""
    t = pl.program_id(1)
    n_chunks = tl // cl
    need_mask = (hw % tl) != 0  # static: only boundary tiles can hold garbage lanes

    def accumulate(start, acc):
        loss = _focal_chunk_loss(logits_ref, labels_ref, start, cl, gamma)
        if need_mask:
            lane = jax.lax.broadcasted_iota(jnp.int32, loss.shape, 1)
            loss = jnp.where(t * tl + start + lane < hw, loss, 0.0)
        p = loss[:, 0:128]
        for k in range(1, cl // 128):                # static fold cl -> 128 lanes
            p = p + loss[:, k * 128:(k + 1) * 128]
        return acc + p

    acc0 = jnp.zeros((1, 128), jnp.float32)
    if n_chunks == 1:
        out_ref[...] = accumulate(0, acc0)
    else:
        out_ref[...] = jax.lax.fori_loop(
            0, n_chunks,
            lambda j, acc: accumulate(pl.multiple_of(j * cl, cl), acc),
            acc0)


def _focal_elem_kernel(logits_ref, labels_ref, out_ref, *, gamma, tl, cl):
    """Per-element loss: writes (1, tl); boundary output lanes masked by Pallas."""
    n_chunks = tl // cl

    def write(start):
        loss = _focal_chunk_loss(logits_ref, labels_ref, start, cl, gamma)
        out_ref[:, pl.ds(start, cl)] = loss.astype(out_ref.dtype)

    if n_chunks == 1:
        write(0)
    else:
        def body(j, carry):
            write(pl.multiple_of(j * cl, cl))
            return carry
        jax.lax.fori_loop(0, n_chunks, body, 0)


def softmax_focal_loss(logits, labels, gamma=2, reduce=True):
    """Forward of SoftmaxFocalLoss.  logits: (N, C, H, W) float; labels: (N, H, W) int."""
    # TODO(synk): nn.NLLLoss's ignore_index (default -100) is not implemented;
    # labels are assumed to lie in [0, C).
    N, C, H, W = logits.shape
    HW = H * W
    itemsize = jnp.dtype(logits.dtype).itemsize

    vmem_cap = _vmem_capacity_bytes()
    tl, cl, n_tiles = _choose_tiles(N, C, HW, itemsize, vmem_cap)

    # Pure views -- no transpose, no pad, no extra HBM pass over the logits.
    logits_ncl = logits.reshape(N, C, HW)
    lab_dtype = jnp.int16 if C <= 32767 else jnp.int32   # halve label HBM bytes
    labels_n1l = labels.reshape(N, 1, HW).astype(lab_dtype)
    lab_isz = jnp.dtype(lab_dtype).itemsize

    grid = (N, n_tiles)
    in_specs = [
        pl.BlockSpec((None, C, tl), lambda n, t: (n, 0, t)),
        pl.BlockSpec((None, 1, tl), lambda n, t: (n, 0, t)),
    ]
    # TODO(synk): if profiling still shows exposed DMA for very small C, deepen the
    # logits pipeline with pipeline_mode=pl.Buffered(3) on in_specs[0].

    if reduce:
        step_bytes = tl * (C * itemsize + lab_isz) + 128 * 4
        compiler_params = pltpu.CompilerParams(
            dimension_semantics=("parallel", "parallel"),
            vmem_limit_bytes=_vmem_limit(step_bytes, vmem_cap),
        )
        kernel = functools.partial(_focal_psum_kernel, gamma=gamma, hw=HW, tl=tl, cl=cl)
        partials = pl.pallas_call(
            kernel,
            out_shape=jax.ShapeDtypeStruct((N, 1, n_tiles * 128), jnp.float32),
            grid_spec=pltpu.PrefetchScalarGridSpec(
                num_scalar_prefetch=0,
                grid=grid,
                in_specs=in_specs,
                out_specs=pl.BlockSpec((None, 1, 128), lambda n, t: (n, 0, t)),
            ),
            compiler_params=compiler_params,
        )(logits_ncl, labels_n1l)
        # nn.NLLLoss(reduce=True) == mean over all N*H*W elements
        return jnp.sum(partials) / jnp.float32(N * HW)

    out_dtype = (logits.dtype if jnp.issubdtype(jnp.dtype(logits.dtype), jnp.floating)
                 else jnp.float32)
    step_bytes = tl * (C * itemsize + lab_isz + jnp.dtype(out_dtype).itemsize)
    compiler_params = pltpu.CompilerParams(
        dimension_semantics=("parallel", "parallel"),
        vmem_limit_bytes=_vmem_limit(step_bytes, vmem_cap),
    )
    kernel = functools.partial(_focal_elem_kernel, gamma=gamma, tl=tl, cl=cl)
    per_elem = pl.pallas_call(
        kernel,
        out_shape=jax.ShapeDtypeStruct((N, 1, HW), out_dtype),
        grid_spec=pltpu.PrefetchScalarGridSpec(
            num_scalar_prefetch=0,
            grid=grid,
            in_specs=in_specs,
            out_specs=pl.BlockSpec((None, 1, tl), lambda n, t: (n, 0, t)),
        ),
        compiler_params=compiler_params,
    )(logits_ncl, labels_n1l)
    # nn.NLLLoss(reduce=False) returns per-element loss of shape (N, H, W)
    return per_elem.reshape(N, H, W)


def _reference(logits_nchw, labels_nhw, gamma=2, reduce=True):
    # pure-JAX reference mirroring the PyTorch module
    x = logits_nchw.astype(jnp.float32)
    scores = jax.nn.softmax(x, axis=1)
    log_score = jax.nn.log_softmax(x, axis=1)
    weighted = jnp.power(1.0 - scores, gamma) * log_score        # (N, C, H, W)
    onehot = jax.nn.one_hot(labels_nhw, x.shape[1], axis=1,
                            dtype=jnp.float32)                   # (N, C, H, W)
    per_elem = -jnp.sum(weighted * onehot, axis=1)               # (N, H, W)
    return jnp.mean(per_elem) if reduce else per_elem


if __name__ == "__main__":
    key = jax.random.PRNGKey(0)
    k1, k2, k3, k4 = jax.random.split(key, 4)

    # Case 1: lane-aligned spatial size (H*W multiple of 128)
    N, C, H, W = 2, 4, 16, 16
    logits = jax.random.normal(k1, (N, C, H, W), dtype=jnp.float32)
    labels = jax.random.randint(k2, (N, H, W), 0, C, dtype=jnp.int32)

    loss = jax.block_until_ready(softmax_focal_loss(logits, labels, gamma=2, reduce=True))
    loss_ne = jax.block_until_ready(softmax_focal_loss(logits, labels, gamma=2, reduce=False))
    assert jnp.allclose(loss, _reference(logits, labels, 2, True), atol=1e-5, rtol=1e-5)
    assert jnp.allclose(loss_ne, _reference(logits, labels, 2, False), atol=1e-5, rtol=1e-5)

    # Case 2: H*W NOT a multiple of 128 -> exercises boundary blocks (no host pad)
    N2, C2, H2, W2 = 2, 4, 10, 13
    logits2 = jax.random.normal(k3, (N2, C2, H2, W2), dtype=jnp.float32)
    labels2 = jax.random.randint(k4, (N2, H2, W2), 0, C2, dtype=jnp.int32)

    loss2 = jax.block_until_ready(softmax_focal_loss(logits2, labels2, gamma=2, reduce=True))
    loss2_ne = jax.block_until_ready(softmax_focal_loss(logits2, labels2, gamma=2, reduce=False))
    assert jnp.allclose(loss2, _reference(logits2, labels2, 2, True), atol=1e-5, rtol=1e-5)
    assert jnp.allclose(loss2_ne, _reference(logits2, labels2, 2, False), atol=1e-5, rtol=1e-5)

    print("KERNEL_OK")
</pallas_src>

<mosaic_0001>
module attributes {stable_mosaic.version = 11 : i64} {
  func.func @_focal_psum_kernel(%arg0: i32, %arg1: i32, %arg2: memref<1x4x256xf32, #tpu.memory_space<vmem>>, %arg3: memref<1x1x256xi16, #tpu.memory_space<vmem>>, %arg4: memref<1x1x128xf32, #tpu.memory_space<vmem>>) attributes {dimension_semantics = [#tpu.dimension_semantics<parallel>, #tpu.dimension_semantics<parallel>], iteration_bounds = array<i64: 2, 1>, scalar_prefetch = 0 : i64, scratch_operands = 0 : i64, tpu.core_type = #tpu.core_type<tc>, window_params = [{transform_indices = @transform_0, window_bounds = array<i64: 1, 4, 256>}, {transform_indices = @transform_1, window_bounds = array<i64: 1, 1, 256>}, {transform_indices = @transform_2, window_bounds = array<i64: 1, 1, 128>}]} {
    %cst = arith.constant 0.000000e+00 : f32
    %0 = vector.broadcast %cst : f32 to vector<1x128xf32>
    %c0 = arith.constant 0 : index
    %c0_0 = arith.constant 0 : index
    %c0_1 = arith.constant 0 : index
    %1 = vector.load %arg2[%c0, %c0_0, %c0_1] : memref<1x4x256xf32, #tpu.memory_space<vmem>>, vector<1x4x256xf32>
    %2 = vector.shape_cast %1 : vector<1x4x256xf32> to vector<4x256xf32>
    %c0_2 = arith.constant 0 : index
    %c0_3 = arith.constant 0 : index
    %c0_4 = arith.constant 0 : index
    %3 = vector.load %arg3[%c0_2, %c0_3, %c0_4] : memref<1x1x256xi16, #tpu.memory_space<vmem>>, vector<1x1x256xi16>
    %4 = vector.shape_cast %3 : vector<1x1x256xi16> to vector<1x256xi16>
    %5 = arith.extsi %4 : vector<1x256xi16> to vector<1x256xi32>
    %6 = tpu.iota {dimensions = array<i32: 0>} : vector<4x256xi32>
    %7 = vector.broadcast %5 : vector<1x256xi32> to vector<4x256xi32>
    %8 = arith.cmpi eq, %6, %7 : vector<4x256xi32>
    %cst_5 = arith.constant 0.000000e+00 : f32
    %9 = vector.broadcast %cst_5 : f32 to vector<4x256xf32>
    %10 = arith.select %8, %2, %9 : vector<4x256xi1>, vector<4x256xf32>
    %cst_6 = arith.constant dense<0.000000e+00> : vector<256xf32>
    %11 = vector.multi_reduction <add>, %10, %cst_6 [0] : vector<4x256xf32> to vector<256xf32>
    %12 = vector.shape_cast %11 : vector<256xf32> to vector<1x256xf32>
    %cst_7 = arith.constant dense<0xFF800000> : vector<256xf32>
    %13 = vector.multi_reduction <maximumf>, %2, %cst_7 [0] : vector<4x256xf32> to vector<256xf32>
    %14 = vector.shape_cast %13 : vector<256xf32> to vector<1x256xf32>
    %15 = vector.broadcast %14 : vector<1x256xf32> to vector<4x256xf32>
    %16 = arith.subf %2, %15 : vector<4x256xf32>
    %17 = math.exp %16 : vector<4x256xf32>
    %cst_8 = arith.constant dense<0.000000e+00> : vector<256xf32>
    %18 = vector.multi_reduction <add>, %17, %cst_8 [0] : vector<4x256xf32> to vector<256xf32>
    %19 = vector.shape_cast %18 : vector<256xf32> to vector<1x256xf32>
    %20 = arith.subf %12, %14 : vector<1x256xf32>
    %21 = math.log %19 : vector<1x256xf32>
    %22 = arith.subf %20, %21 : vector<1x256xf32>
    %23 = math.exp %22 : vector<1x256xf32>
    %cst_9 = arith.constant 1.000000e+00 : f32
    %24 = vector.broadcast %cst_9 : f32 to vector<1x256xf32>
    %25 = arith.subf %24, %23 : vector<1x256xf32>
    %26 = arith.mulf %25, %25 : vector<1x256xf32>
    %27 = arith.mulf %26, %22 : vector<1x256xf32>
    %cst_10 = arith.constant 0.000000e+00 : f32
    %28 = vector.broadcast %cst_10 : f32 to vector<1x256xf32>
    %29 = arith.subf %28, %27 : vector<1x256xf32>
    %30 = vector.extract_strided_slice %29 {offsets = [0, 0], sizes = [1, 128], strides = [1, 1]} : vector<1x256xf32> to vector<1x128xf32>
    %31 = vector.extract_strided_slice %29 {offsets = [0, 128], sizes = [1, 128], strides = [1, 1]} : vector<1x256xf32> to vector<1x128xf32>
    %32 = arith.addf %30, %31 : vector<1x128xf32>
    %33 = arith.addf %0, %32 : vector<1x128xf32>
    %c0_11 = arith.constant 0 : index
    %c0_12 = arith.constant 0 : index
    %c0_13 = arith.constant 0 : index
    %34 = vector.load %arg4[%c0_11, %c0_12, %c0_13] : memref<1x1x128xf32, #tpu.memory_space<vmem>>, vector<1x1x128xf32>
    %35 = vector.shape_cast %34 : vector<1x1x128xf32> to vector<1x128xf32>
    %36 = vector.shape_cast %33 : vector<1x128xf32> to vector<1x1x128xf32>
    tpu.vector_store %arg4[%c0_11, %c0_12, %c0_13], %36 {strides = array<i32>} : memref<1x1x128xf32, #tpu.memory_space<vmem>>, vector<1x1x128xf32>,
    return
  }
  func.func @transform_0(%arg0: i32, %arg1: i32) -> (i32, i32, i32) {
    %c0_i32 = arith.constant 0 : i32
    %c0_i32_0 = arith.constant 0 : i32
    return %arg0, %c0_i32, %arg1 : i32, i32, i32
  }
  func.func @transform_1(%arg0: i32, %arg1: i32) -> (i32, i32, i32) {
    %c0_i32 = arith.constant 0 : i32
    %c0_i32_0 = arith.constant 0 : i32
    return %arg0, %c0_i32, %arg1 : i32, i32, i32
  }
  func.func @transform_2(%arg0: i32, %arg1: i32) -> (i32, i32, i32) {
    %c0_i32 = arith.constant 0 : i32
    %c0_i32_0 = arith.constant 0 : i32
    return %arg0, %c0_i32, %arg1 : i32, i32, i32
  }
}

</mosaic_0001>

<llo_original>
// kernel: tpu_custom_call.1
$region0: #{tpu_custom_call.1}
  #allocation0 [shape = 'u32[]', space=smem, size = 0x4, offset = 0x4, fixed_abs, tag = 'smem constant byte address 0x4 - core index']
  #allocation1 [shape = 'u32[72,128]{1,0:T(1,128)}', space=vmem, size = 0x9000, scoped, tag = 'internal scratch']
  %s0 = inlined_call_operand.hbm [shape: f32[2,4,256], index: 0, kind: input, shape index: {}]
  %s1 = inlined_call_operand.vmem [shape: s16[2,1,256], index: 1, kind: input, shape index: {}]
  %s2 = inlined_call_operand.hbm [shape: f32[2,1,128], index: 2, kind: output, shape index: {}]
  %s3 = sld [smem:[#allocation0]]
  $region45: #{tpu_custom_call.1} parent=0
    _
  %s5 = ssub.s32 1, %s3
  %s6 = scalar_select 0, %s5, %s3
  $region1: #{tpu_custom_call.1} parent=0
    #allocation2 [shape = 'u8[8192]{0}', space=vmem, size = 0x2000, scoped, tag = 'input window, operand 0']
    #allocation3 [shape = 's32[2]{0}', space=sflag, size = 0x8, scoped, tag = 'scoped memory for tpu_custom_call.1']
    #allocation4 [shape = 's32[2]{0}', space=sflag, size = 0x8, scoped, tag = 'scoped memory for tpu_custom_call.1']
    #allocation5 [shape = 'u8[1024]{0}', space=vmem, size = 0x400, scoped, tag = 'output window, operand 0']
    %7 = vsyncpa [#allocation3], 0
    %s8 = scalar_lea.sflag [#allocation3], 1
    %9 = vsyncpa %s8, 0
    %10 = vsyncpa [#allocation4], 0
    %s11 = scalar_lea.sflag [#allocation4], 1
    %12 = vsyncpa %s11, 0
    loop: start=0, step=1, limit=4
    $region2: #{tpu_custom_call.1} parent=1 // loop_pre_header
      _
    $region3: #{tpu_custom_call.1} parent=1 // loop_header
      %s14 = sphi 0, %s18
      %p15 = scmp.ge.s32.totalorder %s14, 4
      %s21 = sphi 0, %s33
      %s22 = sphi 0, %s29
      %s23 = sphi 0, %s21
      %s24 = sphi 0, %s22
      %s25 = sphi 0, %s23
      %s26 = sphi 0, %s24
      %s38 = sphi 0, %s40
      %s41 = sphi 0, %s38
      %s42 = sphi 0, %s41
      %s58 = sphi 0, %s42
      %s66 = sphi 0, %s68
      %s69 = sphi 0, %s66
      %s70 = sphi 0, %s69
      %s86 = sphi 0, %s70
      %s94 = sphi 0, %s96
      %s97 = sphi 0, %s94
      %s98 = sphi 0, %s97
      %s114 = sphi 0, %s98
    $region4: #{tpu_custom_call.1} parent=1 // loop_header_branch
      %17 = sbr.rel (%p15) target = $region8
    $region5: #{tpu_custom_call.1} parent=1 // loop_body
      %s19 = ssub.s32 %s14, 1
      %s20 = ssub.s32 %s14, 2
      %s27 = sadd.s32 1, %s22
      %p28 = scmp.ge.s32.totalorder %s27, 1
      %s29 = scalar_select %p28, 0, %s27
      %s30 = sadd.s32 1, %s21
      %s31 = scalar_select %p28, %s30, %s21
      %p32 = scmp.ge.s32.totalorder %s31, 2
      %s33 = scalar_select %p32, 0, %s31
      %s34 = ssub.s32 %s21, %s33
      %s35 = ssub.s32 %s22, %s29
      %s36 = sor.u32 %s34, %s35
      %p37 = scmp.eq.s32.totalorder %s36, 0
      %s39 = sadd.s32 %s38, 1
      %s40 = scalar_select %p37, %s38, %s39
      %p43 = pneg %p37
      %p44 = scmp.eq.s32.totalorder %s14, 1
      %p45 = por %p43, %p44
      %p46 = scmp.ne.s32.totalorder %s38, %s41
      %p47 = scmp.eq.s32.totalorder %s14, 0
      %p48 = por %p46, %p47
      %p49 = scmp.ne.s32.totalorder %s38, %s41
      %p50 = scmp.eq.s32.totalorder %s19, 1
      %p51 = por %p49, %p50
      %p52 = scmp.ne.s32.totalorder %s41, %s42
      %p53 = scmp.eq.s32.totalorder %s19, 0
      %p54 = por %p52, %p53
      %p55 = scmp.ne.s32.totalorder %s41, %s42
      %p56 = scmp.eq.s32.totalorder %s20, 1
      %p57 = por %p55, %p56
      %p59 = scmp.ne.s32.totalorder %s42, %s58
      %p60 = scmp.eq.s32.totalorder %s20, 0
      %p61 = por %p59, %p60
      %s62 = ssub.s32 %s21, %s33
      %s63 = ssub.s32 %s22, %s29
      %s64 = sor.u32 %s62, %s63
      %p65 = scmp.eq.s32.totalorder %s64, 0
      %s67 = sadd.s32 %s66, 1
      %s68 = scalar_select %p65, %s66, %s67
      %p71 = pneg %p65
      %p72 = scmp.eq.s32.totalorder %s14, 1
      %p73 = por %p71, %p72
      %p74 = scmp.ne.s32.totalorder %s66, %s69
      %p75 = scmp.eq.s32.totalorder %s14, 0
      %p76 = por %p74, %p75
      %p77 = scmp.ne.s32.totalorder %s66, %s69
      %p78 = scmp.eq.s32.totalorder %s19, 1
      %p79 = por %p77, %p78
      %p80 = scmp.ne.s32.totalorder %s69, %s70
      %p81 = scmp.eq.s32.totalorder %s19, 0
      %p82 = por %p80, %p81
      %p83 = scmp.ne.s32.totalorder %s69, %s70
      %p84 = scmp.eq.s32.totalorder %s20, 1
      %p85 = por %p83, %p84
      %p87 = scmp.ne.s32.totalorder %s70, %s86
      %p88 = scmp.eq.s32.totalorder %s20, 0
      %p89 = por %p87, %p88
      %s90 = ssub.s32 %s21, %s33
      %s91 = ssub.s32 %s22, %s29
      %s92 = sor.u32 %s90, %s91
      %p93 = scmp.eq.s32.totalorder %s92, 0
      %s95 = sadd.s32 %s94, 1
      %s96 = scalar_select %p93, %s94, %s95
      %p99 = pneg %p93
      %p100 = scmp.eq.s32.totalorder %s14, 1
      %p101 = por %p99, %p100
      %p102 = scmp.ne.s32.totalorder %s94, %s97
      %p103 = scmp.eq.s32.totalorder %s14, 0
      %p104 = por %p102, %p103
      %p105 = scmp.ne.s32.totalorder %s94, %s97
      %p106 = scmp.eq.s32.totalorder %s19, 1
      %p107 = por %p105, %p106
      %p108 = scmp.ne.s32.totalorder %s97, %s98
      %p109 = scmp.eq.s32.totalorder %s19, 0
      %p110 = por %p108, %p109
      %p111 = scmp.ne.s32.totalorder %s97, %s98
      %p112 = scmp.eq.s32.totalorder %s20, 1
      %p113 = por %p111, %p112
      %p115 = scmp.ne.s32.totalorder %s98, %s114
      %p116 = scmp.eq.s32.totalorder %s20, 0
      %p117 = por %p115, %p116
      %p118 = scmp.le.s32.totalorder 1, %s14
      %p119 = scmp.lt.s32.totalorder %s14, 3
      %p120 = pnand %p118, %p119
      %p121 = pneg %p120
      // Predicated region
      $region9: #{tpu_custom_call.1} parent=5 // pred_check
        _
      $region10: #{tpu_custom_call.1} parent=5 // pred_check_branch
        %123 = sbr.rel (%p120) target = $region12
      $region11: #{tpu_custom_call.1} parent=5 // pred_region
        %s124 = ssub.s32 %s14, 1
      $region12: #{tpu_custom_call.1} parent=5 // pred_fallthru
        _
      %p125 = scmp.lt.s32.totalorder %s14, 2
      // Predicated region
      $region13: #{tpu_custom_call.1} parent=5 // pred_check
        %p126 = pneg %p125
      $region14: #{tpu_custom_call.1} parent=5 // pred_check_branch
        %128 = sbr.rel (%p126) target = $region16
      $region15: #{tpu_custom_call.1} parent=5 // pred_region
        // Predicated region
        $region17: #{tpu_custom_call.1} parent=15 // pred_check
          %p129 = pneg %p48
        $region18: #{tpu_custom_call.1} parent=15 // pred_check_branch
          %131 = sbr.rel (%p129) target = $region20
        $region19: #{tpu_custom_call.1} parent=15 // pred_region
          %s132 = sand.u32 %s38, 1
          %s133 = scalar_lea.sflag [#allocation3], %s132
          %s134 = sand.u32 %s38, 1
          %s135 = smul.addr %s134, 8
          %s136 = scalar_lea.vmem [#allocation2], %s135
          %s137 = smul.u32 2, %s22
          %139 = vsyncadd %s133, 0
          %s140 = smul.addr %s21, 2
          %s141 = sadd.s32 %s137, %s140
          %s142 = smul.addr %s141, 4
          %s143 = scalar_lea.hbm %s0, %s142
          %s145 = sshll.u32 %s143, 4
          %s146 = int_to_ptr.hbm [resolvable:$true] %s145
          %s147 = sshll.u32 %s136, 4
          %s148 = int_to_ptr.vmem [resolvable:$true] %s147
          %150 = dma.hbm_to_vmem [thread:$0]  %s146, 128, %s148, %s133
        $region20: #{tpu_custom_call.1} parent=15 // pred_fallthru
          _
        // Predicated region
        $region21: #{tpu_custom_call.1} parent=15 // pred_check
          %p151 = pneg %p76
        $region22: #{tpu_custom_call.1} parent=15 // pred_check_branch
          %153 = sbr.rel (%p151) target = $region24
        $region23: #{tpu_custom_call.1} parent=15 // pred_region
          %s154 = smul.u32 2, %s22
          %p155 = scmp.lt.s32.totalorder %s21, 1
          %s156 = scalar_select %p155, %s21, 1
          %p157 = scmp.lt.s32.totalorder %s154, 1
          %s158 = scalar_select %p157, %s154, 1
          %s159 = smul.addr %s156, 2
          %s160 = sadd.s32 %s158, %s159
          %s161 = scalar_lea.vmem %s1, %s160
          %s162 = smul.u32 2, %s22
        $region24: #{tpu_custom_call.1} parent=15 // pred_fallthru
          _
      $region16: #{tpu_custom_call.1} parent=5 // pred_fallthru
        _
      %p163 = scmp.le.s32.totalorder 1, %s14
      %p164 = scmp.lt.s32.totalorder %s14, 3
      %p165 = pnand %p163, %p164
      %p166 = pneg %p165
      // Predicated region
      $region25: #{tpu_custom_call.1} parent=5 // pred_check
        _
      $region26: #{tpu_custom_call.1} parent=5 // pred_check_branch
        %168 = sbr.rel (%p165) target = $region28
      $region27: #{tpu_custom_call.1} parent=5 // pred_region
        %s169 = ssub.s32 %s14, 1
        %s170 = sand.u32 %s41, 1
        %s171 = scalar_lea.sflag [#allocation3], %s170
        %s172 = sand.u32 %s41, 1
        %s173 = smul.addr %s172, 8
        %s174 = scalar_lea.vmem [#allocation2], %s173
        // Predicated region
        $region29: #{tpu_custom_call.1} parent=27 // pred_check
          %p175 = pneg %p54
        $region30: #{tpu_custom_call.1} parent=27 // pred_check_branch
          %177 = sbr.rel (%p175) target = $region32
        $region31: #{tpu_custom_call.1} parent=27 // pred_region
          %179 = dma.done %s171, 128
        $region32: #{tpu_custom_call.1} parent=27 // pred_fallthru
          _
        %s180 = sand.u32 %s41, 1
        %s181 = scalar_lea.sflag [#allocation3], %s180
        %s182 = sand.u32 %s41, 1
        %s183 = smul.addr %s182, 8
        %s184 = scalar_lea.vmem [#allocation2], %s183
        %p185 = pneg %p54
        %p186 = pneg %p51
        %s187 = smul.u32 2, %s24
        %p188 = scmp.lt.s32.totalorder %s23, 1
        %s189 = scalar_select %p188, %s23, 1
        %p190 = scmp.lt.s32.totalorder %s187, 1
        %s191 = scalar_select %p190, %s187, 1
        %s192 = smul.addr %s189, 2
        %s193 = sadd.s32 %s191, %s192
        %s194 = scalar_lea.vmem %s1, %s193
        %p195 = pneg %p82
        %p196 = pneg %p79
        %p197 = pneg %p110
        %p198 = pneg %p107
        %s199 = sand.u32 %s97, 1
        %s200 = scalar_lea.sflag [#allocation4], %s199
        %s201 = sand.u32 %s97, 1
        %s202 = scalar_lea.vmem [#allocation5], %s201
        %s203 = smul.u32 2, %s24
        %s204 = smul.u32 2, %s24
        %p205 = scmp.lt.s32.totalorder %s23, 1
        %s206 = scalar_select %p205, %s23, 1
        %p207 = scmp.lt.s32.totalorder %s204, 1
        %s208 = scalar_select %p207, %s204, 1
        %s209 = smul.addr %s206, 2
        %s210 = sadd.s32 %s208, %s209
        %s211 = scalar_lea.vmem %s1, %s210
        %s212 = smul.u32 2, %s24
        %v213 = vld [vmem:[%s174] sm:$0xff]
        %v214 = vld [vmem:[%s211] sm:$0x3]
        %v215 = vunpack.c.l.b16 %v214
        %v216 = vlaneseq
        %v217 = vshrl.u32 %v216, 7
        %v218 = vperm.slane %v215, 0
        %v219 = vperm.slane %v215, 2
        %v220 = vperm.slane %v218, 0
        %v221 = vperm.slane %v219, 0
        %vm222 = vcmp.eq.s32.totalorder %v217, %v220
        %vm223 = vcmp.eq.s32.totalorder %v217, %v221
        %225 = vst [vmem:[#allocation1] ss:$2 sm:$0xff] %v213
        %v226 = vld.sshfl [vmem:[#allocation1] sm:$0xff pattern:$0x75316420]
        %v227 = vld.sshfl [vmem:[#allocation1 + $0x8] sm:$0xff pattern:$0x75316420]
        %v230 = vsel %vm222, %v226, 0.0
        %v231 = vsel %vm223, %v227, 0.0
        %vm232 = vcmask 1043456
        %v233 = vsel %vm232, %v230, 0.0
        %v234 = vrot.slane %v233, 4
        %v235 = vadd.f32 %v233, %v234
        %v236 = vrot.slane %v235, 2
        %v237 = vadd.f32 %v235, %v236
        %v238 = vrot.slane %v237, 1
        %v239 = vadd.f32 %v237, %v238
        %v240 = vsel %vm232, %v231, 0.0
        %v241 = vrot.slane %v240, 4
        %v242 = vadd.f32 %v240, %v241
        %v243 = vrot.slane %v242, 2
        %v244 = vadd.f32 %v242, %v243
        %v245 = vrot.slane %v244, 1
        %v246 = vadd.f32 %v244, %v245
        %247 = vst [vmem:[#allocation1] ss:$2 sm:$0xff] %v213
        %v248 = vld.sshfl [vmem:[#allocation1] sm:$0xff pattern:$0x75316420]
        %v249 = vld.sshfl [vmem:[#allocation1 + $0x8] sm:$0xff pattern:$0x75316420]
        %v252 = vsel %vm232, %v248, -inf
        %v253 = vrot.slane %v252, 4
        %v254 = vmax.f32 %v252, %v253
        %v255 = vrot.slane %v254, 2
        %v256 = vmax.f32 %v254, %v255
        %v257 = vrot.slane %v256, 1
        %v258 = vmax.f32 %v256, %v257
        %v259 = vsel %vm232, %v249, -inf
        %v260 = vrot.slane %v259, 4
        %v261 = vmax.f32 %v259, %v260
        %v262 = vrot.slane %v261, 2
        %v263 = vmax.f32 %v261, %v262
        %v264 = vrot.slane %v263, 1
        %v265 = vmax.f32 %v263, %v264
        %v268 = vrot.slane %v265, 4
        %v269 = vsel %vm232, %v258, %v268
        %v271 = vsub.f32 %v213, %v269
        %v272 = vmul.f32 %v271, 1.442695
        %v273 = vpow.pop %v272
        %275 = vst [vmem:[#allocation1] ss:$2 sm:$0xff] %v273
        %v276 = vld.sshfl [vmem:[#allocation1] sm:$0xff pattern:$0x75316420]
        %v277 = vld.sshfl [vmem:[#allocation1 + $0x8] sm:$0xff pattern:$0x75316420]
        %v280 = vsel %vm232, %v276, 0.0
        %v281 = vrot.slane %v280, 4
        %v282 = vadd.f32 %v280, %v281
        %v283 = vrot.slane %v282, 2
        %v284 = vadd.f32 %v282, %v283
        %v285 = vrot.slane %v284, 1
        %v286 = vadd.f32 %v284, %v285
        %v287 = vsel %vm232, %v277, 0.0
        %v288 = vrot.slane %v287, 4
        %v289 = vadd.f32 %v287, %v288
        %v290 = vrot.slane %v289, 2
        %v291 = vadd.f32 %v289, %v290
        %v292 = vrot.slane %v291, 1
        %v293 = vadd.f32 %v291, %v292
        %v294 = vsub.f32 %v239, %v258
        %v295 = vsub.f32 %v246, %v265
        %v296 = vlog2.pop %v286
        %v297 = vmul.f32 %v296, 0.6931472
        %v298 = vlog2.pop %v293
        %v299 = vmul.f32 %v298, 0.6931472
        %v300 = vsub.f32 %v294, %v297
        %v301 = vsub.f32 %v295, %v299
        %v302 = vmul.f32 %v300, 1.442695
        %v303 = vpow.pop %v302
        %v304 = vmul.f32 %v301, 1.442695
        %v305 = vpow.pop %v304
        %v306 = vsub.f32 1.0, %v303
        %v307 = vsub.f32 1.0, %v305
        %v308 = vmul.f32 %v306, %v306
        %v309 = vmul.f32 %v307, %v307
        %v310 = vmul.f32 %v308, %v300
        %v311 = vmul.f32 %v309, %v301
        %v312 = vsub.f32 0.0, %v310
        %v313 = vsub.f32 0.0, %v311
        %v314 = vadd.f32 %v312, %v313
        %v315 = vadd.f32 %v314, 0.0
        %316 = vst [vmem:[%s202] sm:$0x1] %v315
        %s317 = sand.u32 %s97, 1
        %s318 = scalar_lea.sflag [#allocation4], %s317
        %s319 = sand.u32 %s97, 1
        %s320 = scalar_lea.vmem [#allocation5], %s319
        // Predicated region
        $region33: #{tpu_custom_call.1} parent=27 // pred_check
          %p321 = pneg %p107
        $region34: #{tpu_custom_call.1} parent=27 // pred_check_branch
          %323 = sbr.rel (%p321) target = $region36
        $region35: #{tpu_custom_call.1} parent=27 // pred_region
          %325 = vsyncadd %s318, 0
          %s326 = sadd.s32 %s24, %s23
          %s327 = scalar_lea.hbm %s2, %s326
          %s329 = sshll.u32 %s320, 4
          %s330 = int_to_ptr.vmem [resolvable:$true] %s329
          %s331 = sshll.u32 %s327, 4
          %s332 = int_to_ptr.hbm [resolvable:$true] %s331
          %334 = dma.vmem_to_hbm [thread:$0]  %s330, 16, %s332, %s318
        $region36: #{tpu_custom_call.1} parent=27 // pred_fallthru
          _
      $region28: #{tpu_custom_call.1} parent=5 // pred_fallthru
        _
      %p335 = scmp.le.s32.totalorder 2, %s14
      // Predicated region
      $region37: #{tpu_custom_call.1} parent=5 // pred_check
        %p336 = pneg %p335
      $region38: #{tpu_custom_call.1} parent=5 // pred_check_branch
        %338 = sbr.rel (%p336) target = $region40
      $region39: #{tpu_custom_call.1} parent=5 // pred_region
        %s339 = ssub.s32 %s14, 2
        // Predicated region
        $region41: #{tpu_custom_call.1} parent=39 // pred_check
          %p340 = pneg %p113
        $region42: #{tpu_custom_call.1} parent=39 // pred_check_branch
          %342 = sbr.rel (%p340) target = $region44
        $region43: #{tpu_custom_call.1} parent=39 // pred_region
          %s343 = sand.u32 %s98, 1
          %s344 = scalar_lea.sflag [#allocation4], %s343
          %s345 = sand.u32 %s98, 1
          %s346 = scalar_lea.vmem [#allocation5], %s345
          %348 = dma.done %s344, 16
        $region44: #{tpu_custom_call.1} parent=39 // pred_fallthru
          _
      $region40: #{tpu_custom_call.1} parent=5 // pred_fallthru
        _
    $region6: #{tpu_custom_call.1} parent=1 // loop_footer
      %s18 = sadd.s32 1, %s14
    $region7: #{tpu_custom_call.1} parent=1 // loop_footer_branch
      %13 = sbr.rel target = $region3
    $region8: #{tpu_custom_call.1} parent=1 // loop_exit
      _
    %349 = vsyncpa [#allocation3], 1
    %s350 = scalar_lea.sflag [#allocation3], 1
    %351 = vsyncpa %s350, 1
    %352 = vsyncpa [#allocation4], 1
    %s353 = scalar_lea.sflag [#allocation4], 1
    %354 = vsyncpa %s353, 1

</llo_original>
